<compile_context>
chip_gen: v6e
topology: v6e:2x2x1
jax: 0.10.0
libtpu: 0.0.40
codegen_flags: <defaults>
</compile_context>

<pallas_src>
import functools

import jax
import jax.numpy as jnp
from jax.experimental import pallas as pl
from jax.experimental.pallas import tpu as pltpu


def _qfunc_kernel(obs_ref, act_ref, w1o_ref, w1a_ref, b1_ref,
                  w2_ref, b2_ref, w3_ref, b3_ref, o_ref):
    # obs_ref: [tb, obs_dim]      act_ref: [tb, act_dim]
    # w1o: [obs_dim, 128] bf16    w1a: [act_dim, 128] bf16   b1: [1, 128] f32
    # w2:  [128, 128]     bf16                               b2: [1, 128] f32
    # w3:  [128, out_dim] bf16                               b3: [1, out_dim] f32
    obs = obs_ref[...].astype(jnp.bfloat16)
    act = act_ref[...].astype(jnp.bfloat16)

    # Layer 1: split matmul replaces concat([obs, action]) @ W1.
    h1 = (jnp.dot(obs, w1o_ref[...], preferred_element_type=jnp.float32)
          + jnp.dot(act, w1a_ref[...], preferred_element_type=jnp.float32)
          + b1_ref[...])
    h1 = jnp.maximum(h1, 0.0)

    # Layer 2.
    h2 = jnp.dot(h1.astype(jnp.bfloat16), w2_ref[...],
                 preferred_element_type=jnp.float32) + b2_ref[...]
    h2 = jnp.maximum(h2, 0.0)

    # Layer 3: store the true (tb, out_dim) result directly (no lane padding).
    out = jnp.dot(h2.astype(jnp.bfloat16), w3_ref[...],
                  preferred_element_type=jnp.float32) + b3_ref[...]
    o_ref[...] = out.astype(o_ref.dtype)


def _round_up(x, m):
    return ((x + m - 1) // m) * m


def pack_qfunction_params(params, obs_dim):
    """One-time packing of the torch-style params into kernel-ready buffers.

    Call this once per parameter update, NOT per forward pass.
    """
    w1, b1, w2, b2, w3, b3 = params
    hidden = w1.shape[1]
    out_dim = w3.shape[1]
    return (
        jnp.asarray(w1[:obs_dim, :], jnp.bfloat16),            # W1 rows for obs
        jnp.asarray(w1[obs_dim:, :], jnp.bfloat16),            # W1 rows for action
        jnp.asarray(b1, jnp.float32).reshape(1, hidden),       # b1 as a row
        jnp.asarray(w2, jnp.bfloat16),                         # W2
        jnp.asarray(b2, jnp.float32).reshape(1, hidden),       # b2 as a row
        jnp.asarray(w3, jnp.bfloat16),                         # W3
        jnp.asarray(b3, jnp.float32).reshape(1, out_dim),      # b3 as a row
    )


@functools.partial(jax.jit, static_argnames=("block_b",))
def qfunction_forward(obs, action, packed_params, *, block_b=1024):
    """Fused 3-layer MLP forward. obs: [B, obs_dim], action: [B, act_dim].

    `packed_params` must come from pack_qfunction_params(). Output is f32.
    """
    w1o, w1a, b1, w2, b2, w3, b3 = packed_params
    B, obs_dim = obs.shape
    _, act_dim = action.shape
    hidden = w1o.shape[1]
    out_dim = w3.shape[1]

    # Batch tile: at least 2 grid steps when B >= 16 so the "parallel" axis can
    # shard across v7x's two TensorCores (harmless on single-TC v5e/v6e); tb is
    # a multiple of 8 (or == B for tiny batches); block_b caps per-step VMEM for
    # very large batches while keeping tiles big enough to amortize grid-step
    # overhead.
    if B >= 16:
        tb = min(block_b, _round_up(pl.cdiv(B, 2), 8))
    else:
        tb = B
    grid = (pl.cdiv(B, tb),)

    # Constant-index weight/bias specs are only DMA'd once by the pipeline; the
    # redundant second buffer costs ~74 KB of VMEM, which is negligible here.
    # TODO(synk): single-buffer them via pipeline_mode=pl.Buffered(1) if VMEM
    # headroom ever becomes a concern at much larger block_b.
    return pl.pallas_call(
        _qfunc_kernel,
        out_shape=jax.ShapeDtypeStruct((B, out_dim), jnp.float32),
        grid_spec=pltpu.PrefetchScalarGridSpec(
            num_scalar_prefetch=0,
            grid=grid,
            in_specs=[
                pl.BlockSpec((tb, obs_dim), lambda i: (i, 0)),      # obs tile
                pl.BlockSpec((tb, act_dim), lambda i: (i, 0)),      # action tile
                pl.BlockSpec((obs_dim, hidden), lambda i: (0, 0)),  # W1[:obs_dim]
                pl.BlockSpec((act_dim, hidden), lambda i: (0, 0)),  # W1[obs_dim:]
                pl.BlockSpec((1, hidden), lambda i: (0, 0)),        # b1
                pl.BlockSpec((hidden, hidden), lambda i: (0, 0)),   # W2
                pl.BlockSpec((1, hidden), lambda i: (0, 0)),        # b2
                pl.BlockSpec((hidden, out_dim), lambda i: (0, 0)),  # W3
                pl.BlockSpec((1, out_dim), lambda i: (0, 0)),       # b3
            ],
            out_specs=pl.BlockSpec((tb, out_dim), lambda i: (i, 0)),
        ),
        compiler_params=pltpu.CompilerParams(
            dimension_semantics=("parallel",),
        ),
    )(obs, action, w1o, w1a, b1, w2, b2, w3, b3)


def xavier_uniform(key, fan_in, fan_out, dtype=jnp.float32):
    # Matches torch.nn.init.xavier_uniform_ (gain=1).
    bound = jnp.sqrt(6.0 / (fan_in + fan_out))
    # Stored as [in, out] so the kernel uses x @ W directly.
    return jax.random.uniform(key, (fan_in, fan_out), dtype, -bound, bound)


def init_qfunction_params(key, obs_dim, action_dim, output_dim, hidden=128):
    in_dim = obs_dim + action_dim
    k1, k2, k3 = jax.random.split(key, 3)
    w1 = xavier_uniform(k1, in_dim, hidden)
    b1 = jnp.zeros((hidden,), jnp.float32)
    w2 = xavier_uniform(k2, hidden, hidden)
    b2 = jnp.zeros((hidden,), jnp.float32)
    w3 = xavier_uniform(k3, hidden, output_dim)
    b3 = jnp.zeros((output_dim,), jnp.float32)
    return (w1, b1, w2, b2, w3, b3)


def qfunction_reference(obs, action, params):
    """Pure-JAX f32 reference for correctness check."""
    w1, b1, w2, b2, w3, b3 = params
    x = jnp.concatenate([obs, action], axis=1)
    x = jnp.maximum(x @ w1 + b1, 0.0)
    x = jnp.maximum(x @ w2 + b2, 0.0)
    return x @ w3 + b3


if __name__ == "__main__":
    obs_dim, action_dim, output_dim = 24, 8, 4
    batch = 64

    key = jax.random.PRNGKey(0)
    k_params, k_obs, k_act = jax.random.split(key, 3)

    params = init_qfunction_params(k_params, obs_dim, action_dim, output_dim)
    obs = jax.random.normal(k_obs, (batch, obs_dim), jnp.float32)
    action = jax.random.normal(k_act, (batch, action_dim), jnp.float32)

    # One-time packing (hoisted out of the per-call forward).
    packed = jax.block_until_ready(pack_qfunction_params(params, obs_dim))

    out = qfunction_forward(obs, action, packed)
    out = jax.block_until_ready(out)

    ref = qfunction_reference(obs, action, params)
    assert out.shape == (batch, output_dim), out.shape
    # bf16 MXU operands with f32 accumulation: allow ~percent-level tolerance.
    assert jnp.allclose(out, ref, atol=5e-2, rtol=5e-2), "mismatch vs reference"

    print("KERNEL_OK")
</pallas_src>

<mosaic_0001>
module attributes {stable_mosaic.version = 11 : i64} {
  func.func @_qfunc_kernel(%arg0: i32, %arg1: memref<32x24xf32, #tpu.memory_space<vmem>>, %arg2: memref<32x8xf32, #tpu.memory_space<vmem>>, %arg3: memref<24x128xbf16, #tpu.memory_space<vmem>>, %arg4: memref<8x128xbf16, #tpu.memory_space<vmem>>, %arg5: memref<1x128xf32, #tpu.memory_space<vmem>>, %arg6: memref<128x128xbf16, #tpu.memory_space<vmem>>, %arg7: memref<1x128xf32, #tpu.memory_space<vmem>>, %arg8: memref<128x4xbf16, #tpu.memory_space<vmem>>, %arg9: memref<1x4xf32, #tpu.memory_space<vmem>>, %arg10: memref<32x4xf32, #tpu.memory_space<vmem>>) attributes {dimension_semantics = [#tpu.dimension_semantics<parallel>], iteration_bounds = array<i64: 2>, scalar_prefetch = 0 : i64, scratch_operands = 0 : i64, tpu.core_type = #tpu.core_type<tc>, window_params = [{transform_indices = @transform_0, window_bounds = array<i64: 32, 24>}, {transform_indices = @transform_1, window_bounds = array<i64: 32, 8>}, {pipeline_mode = #tpu.pipeline_mode<synchronous>, transform_indices = @transform_2, window_bounds = array<i64: 24, 128>}, {pipeline_mode = #tpu.pipeline_mode<synchronous>, transform_indices = @transform_3, window_bounds = array<i64: 8, 128>}, {pipeline_mode = #tpu.pipeline_mode<synchronous>, transform_indices = @transform_4, window_bounds = array<i64: 1, 128>}, {pipeline_mode = #tpu.pipeline_mode<synchronous>, transform_indices = @transform_5, window_bounds = array<i64: 128, 128>}, {pipeline_mode = #tpu.pipeline_mode<synchronous>, transform_indices = @transform_6, window_bounds = array<i64: 1, 128>}, {pipeline_mode = #tpu.pipeline_mode<synchronous>, transform_indices = @transform_7, window_bounds = array<i64: 128, 4>}, {pipeline_mode = #tpu.pipeline_mode<synchronous>, transform_indices = @transform_8, window_bounds = array<i64: 1, 4>}, {transform_indices = @transform_9, window_bounds = array<i64: 32, 4>}]} {
    %c0 = arith.constant 0 : index
    %c0_0 = arith.constant 0 : index
    %0 = vector.load %arg1[%c0, %c0_0] : memref<32x24xf32, #tpu.memory_space<vmem>>, vector<32x24xf32>
    %1 = arith.truncf %0 : vector<32x24xf32> to vector<32x24xbf16>
    %c0_1 = arith.constant 0 : index
    %c0_2 = arith.constant 0 : index
    %2 = vector.load %arg2[%c0_1, %c0_2] : memref<32x8xf32, #tpu.memory_space<vmem>>, vector<32x8xf32>
    %3 = arith.truncf %2 : vector<32x8xf32> to vector<32x8xbf16>
    %c0_3 = arith.constant 0 : index
    %c0_4 = arith.constant 0 : index
    %4 = vector.load %arg3[%c0_3, %c0_4] : memref<24x128xbf16, #tpu.memory_space<vmem>>, vector<24x128xbf16>
    %cst = arith.constant dense<0.000000e+00> : vector<32x128xf32>
    %5 = tpu.matmul %1, %4, %cst {dimension_numbers = #tpu.dot_dimension_numbers<[1], [0], [0], [1], [0, 0, 1, 1], [], []>} : vector<32x24xbf16>, vector<24x128xbf16>, vector<32x128xf32> -> vector<32x128xf32>
    %c0_5 = arith.constant 0 : index
    %c0_6 = arith.constant 0 : index
    %6 = vector.load %arg4[%c0_5, %c0_6] : memref<8x128xbf16, #tpu.memory_space<vmem>>, vector<8x128xbf16>
    %cst_7 = arith.constant dense<0.000000e+00> : vector<32x128xf32>
    %7 = tpu.matmul %3, %6, %cst_7 {dimension_numbers = #tpu.dot_dimension_numbers<[1], [0], [0], [1], [0, 0, 1, 1], [], []>} : vector<32x8xbf16>, vector<8x128xbf16>, vector<32x128xf32> -> vector<32x128xf32>
    %8 = arith.addf %5, %7 : vector<32x128xf32>
    %c0_8 = arith.constant 0 : index
    %c0_9 = arith.constant 0 : index
    %9 = vector.load %arg5[%c0_8, %c0_9] : memref<1x128xf32, #tpu.memory_space<vmem>>, vector<1x128xf32>
    %10 = vector.broadcast %9 : vector<1x128xf32> to vector<32x128xf32>
    %11 = arith.addf %8, %10 : vector<32x128xf32>
    %cst_10 = arith.constant 0.000000e+00 : f32
    %12 = vector.broadcast %cst_10 : f32 to vector<32x128xf32>
    %13 = arith.maximumf %11, %12 : vector<32x128xf32>
    %14 = arith.truncf %13 : vector<32x128xf32> to vector<32x128xbf16>
    %c0_11 = arith.constant 0 : index
    %c0_12 = arith.constant 0 : index
    %15 = vector.load %arg6[%c0_11, %c0_12] : memref<128x128xbf16, #tpu.memory_space<vmem>>, vector<128x128xbf16>
    %cst_13 = arith.constant dense<0.000000e+00> : vector<32x128xf32>
    %16 = tpu.matmul %14, %15, %cst_13 {dimension_numbers = #tpu.dot_dimension_numbers<[1], [0], [0], [1], [0, 0, 1, 1], [], []>} : vector<32x128xbf16>, vector<128x128xbf16>, vector<32x128xf32> -> vector<32x128xf32>
    %c0_14 = arith.constant 0 : index
    %c0_15 = arith.constant 0 : index
    %17 = vector.load %arg7[%c0_14, %c0_15] : memref<1x128xf32, #tpu.memory_space<vmem>>, vector<1x128xf32>
    %18 = vector.broadcast %17 : vector<1x128xf32> to vector<32x128xf32>
    %19 = arith.addf %16, %18 : vector<32x128xf32>
    %cst_16 = arith.constant 0.000000e+00 : f32
    %20 = vector.broadcast %cst_16 : f32 to vector<32x128xf32>
    %21 = arith.maximumf %19, %20 : vector<32x128xf32>
    %22 = arith.truncf %21 : vector<32x128xf32> to vector<32x128xbf16>
    %c0_17 = arith.constant 0 : index
    %c0_18 = arith.constant 0 : index
    %23 = vector.load %arg8[%c0_17, %c0_18] : memref<128x4xbf16, #tpu.memory_space<vmem>>, vector<128x4xbf16>
    %cst_19 = arith.constant dense<0.000000e+00> : vector<32x4xf32>
    %24 = tpu.matmul %22, %23, %cst_19 {dimension_numbers = #tpu.dot_dimension_numbers<[1], [0], [0], [1], [0, 0, 1, 1], [], []>} : vector<32x128xbf16>, vector<128x4xbf16>, vector<32x4xf32> -> vector<32x4xf32>
    %c0_20 = arith.constant 0 : index
    %c0_21 = arith.constant 0 : index
    %25 = vector.load %arg9[%c0_20, %c0_21] : memref<1x4xf32, #tpu.memory_space<vmem>>, vector<1x4xf32>
    %26 = vector.broadcast %25 : vector<1x4xf32> to vector<32x4xf32>
    %27 = arith.addf %24, %26 : vector<32x4xf32>
    %c0_22 = arith.constant 0 : index
    %c0_23 = arith.constant 0 : index
    %28 = vector.load %arg10[%c0_22, %c0_23] : memref<32x4xf32, #tpu.memory_space<vmem>>, vector<32x4xf32>
    tpu.vector_store %arg10[%c0_22, %c0_23], %27 {strides = array<i32>} : memref<32x4xf32, #tpu.memory_space<vmem>>, vector<32x4xf32>,
    return
  }
  func.func @transform_0(%arg0: i32) -> (i32, i32) {
    %c0_i32 = arith.constant 0 : i32
    %c0_i32_0 = arith.constant 0 : i32
    return %arg0, %c0_i32 : i32, i32
  }
  func.func @transform_1(%arg0: i32) -> (i32, i32) {
    %c0_i32 = arith.constant 0 : i32
    %c0_i32_0 = arith.constant 0 : i32
    return %arg0, %c0_i32 : i32, i32
  }
  func.func @transform_2(%arg0: i32) -> (i32, i32) {
    %c0_i32 = arith.constant 0 : i32
    %c0_i32_0 = arith.constant 0 : i32
    %c0_i32_1 = arith.constant 0 : i32
    return %c0_i32, %c0_i32_0 : i32, i32
  }
  func.func @transform_3(%arg0: i32) -> (i32, i32) {
    %c0_i32 = arith.constant 0 : i32
    %c0_i32_0 = arith.constant 0 : i32
    %c0_i32_1 = arith.constant 0 : i32
    return %c0_i32, %c0_i32_0 : i32, i32
  }
  func.func @transform_4(%arg0: i32) -> (i32, i32) {
    %c0_i32 = arith.constant 0 : i32
    %c0_i32_0 = arith.constant 0 : i32
    %c0_i32_1 = arith.constant 0 : i32
    return %c0_i32, %c0_i32_0 : i32, i32
  }
  func.func @transform_5(%arg0: i32) -> (i32, i32) {
    %c0_i32 = arith.constant 0 : i32
    %c0_i32_0 = arith.constant 0 : i32
    %c0_i32_1 = arith.constant 0 : i32
    return %c0_i32, %c0_i32_0 : i32, i32
  }
  func.func @transform_6(%arg0: i32) -> (i32, i32) {
    %c0_i32 = arith.constant 0 : i32
    %c0_i32_0 = arith.constant 0 : i32
    %c0_i32_1 = arith.constant 0 : i32
    return %c0_i32, %c0_i32_0 : i32, i32
  }
  func.func @transform_7(%arg0: i32) -> (i32, i32) {
    %c0_i32 = arith.constant 0 : i32
    %c0_i32_0 = arith.constant 0 : i32
    %c0_i32_1 = arith.constant 0 : i32
    return %c0_i32, %c0_i32_0 : i32, i32
  }
  func.func @transform_8(%arg0: i32) -> (i32, i32) {
    %c0_i32 = arith.constant 0 : i32
    %c0_i32_0 = arith.constant 0 : i32
    %c0_i32_1 = arith.constant 0 : i32
    return %c0_i32, %c0_i32_0 : i32, i32
  }
  func.func @transform_9(%arg0: i32) -> (i32, i32) {
    %c0_i32 = arith.constant 0 : i32
    %c0_i32_0 = arith.constant 0 : i32
    return %arg0, %c0_i32 : i32, i32
  }
}

</mosaic_0001>

<llo_original>
// kernel: qfunction_forward.1
$region0: #{qfunction_forward.1}
  #allocation0 [shape = 'u32[]', space=smem, size = 0x4, offset = 0x4, fixed_abs, tag = 'smem constant byte address 0x4 - core index']
  #allocation1 [shape = 'u32[144,128]{1,0:T(1,128)}', space=vmem, size = 0x12000, scoped, tag = 'internal scratch']
  %s0 = inlined_call_operand.vmem [shape: f32[64,24], index: 0, kind: input, shape index: {}]
  %s1 = inlined_call_operand.vmem [shape: f32[64,8], index: 1, kind: input, shape index: {}]
  %s2 = inlined_call_operand.vmem [shape: bf16[24,128], index: 2, kind: input, shape index: {}]
  %s3 = inlined_call_operand.vmem [shape: bf16[8,128], index: 3, kind: input, shape index: {}]
  %s4 = inlined_call_operand.vmem [shape: f32[1,128], index: 4, kind: input, shape index: {}]
  %s5 = inlined_call_operand.vmem [shape: bf16[128,128], index: 5, kind: input, shape index: {}]
  %s6 = inlined_call_operand.vmem [shape: f32[1,128], index: 6, kind: input, shape index: {}]
  %s7 = inlined_call_operand.vmem [shape: bf16[128,4], index: 7, kind: input, shape index: {}]
  %s8 = inlined_call_operand.vmem [shape: f32[1,4], index: 8, kind: input, shape index: {}]
  %s9 = inlined_call_operand.vmem [shape: f32[64,4], index: 9, kind: output, shape index: {}]
  %s10 = sld [smem:[#allocation0]]
  $region69: #{qfunction_forward.1} parent=0
    _
  %s12 = ssub.s32 1, %s10
  %s13 = scalar_select 0, %s12, %s10
  loop: start=0, step=1, limit=4
  $region2: #{qfunction_forward.1} parent=0 // loop_pre_header
    _
  $region3: #{qfunction_forward.1} parent=0 // loop_header
    %s15 = sphi 0, %s19
    %p16 = scmp.ge.s32.totalorder %s15, 4
    %s25 = sphi 0, %s27
    %s28 = sphi 0, %s25
    %s29 = sphi 0, %s28
    %s45 = sphi 0, %s29
    %s51 = sphi 0, %s53
    %s54 = sphi 0, %s51
    %s55 = sphi 0, %s54
    %s71 = sphi 0, %s55
    %s75 = sphi 0, %s75
    %s77 = sphi 0, %s75
    %s78 = sphi 0, %s77
    %s92 = sphi 0, %s78
    %s96 = sphi 0, %s96
    %s98 = sphi 0, %s96
    %s99 = sphi 0, %s98
    %s113 = sphi 0, %s99
    %s117 = sphi 0, %s117
    %s119 = sphi 0, %s117
    %s120 = sphi 0, %s119
    %s134 = sphi 0, %s120
    %s138 = sphi 0, %s138
    %s140 = sphi 0, %s138
    %s141 = sphi 0, %s140
    %s155 = sphi 0, %s141
    %s159 = sphi 0, %s159
    %s161 = sphi 0, %s159
    %s162 = sphi 0, %s161
    %s176 = sphi 0, %s162
    %s180 = sphi 0, %s180
    %s182 = sphi 0, %s180
    %s183 = sphi 0, %s182
    %s197 = sphi 0, %s183
    %s201 = sphi 0, %s201
    %s203 = sphi 0, %s201
    %s204 = sphi 0, %s203
    %s218 = sphi 0, %s204
    %s224 = sphi 0, %s226
    %s227 = sphi 0, %s224
    %s228 = sphi 0, %s227
    %s244 = sphi 0, %s228
  $region4: #{qfunction_forward.1} parent=0 // loop_header_branch
    %18 = sbr.rel (%p16) target = $region8
  $region5: #{qfunction_forward.1} parent=0 // loop_body
    %s20 = ssub.s32 %s15, 1
    %s21 = ssub.s32 %s15, 2
    %s22 = sadd.s32 %s15, 1
    %s23 = ssub.s32 %s15, %s22
    %p24 = scmp.eq.s32.totalorder %s23, 0
    %s26 = sadd.s32 %s25, 1
    %s27 = scalar_select %p24, %s25, %s26
    %p30 = pneg %p24
    %p31 = scmp.eq.s32.totalorder %s15, 1
    %p32 = por %p30, %p31
    %p33 = scmp.ne.s32.totalorder %s25, %s28
    %p34 = scmp.eq.s32.totalorder %s15, 0
    %p35 = por %p33, %p34
    %p36 = scmp.ne.s32.totalorder %s25, %s28
    %p37 = scmp.eq.s32.totalorder %s20, 1
    %p38 = por %p36, %p37
    %p39 = scmp.ne.s32.totalorder %s28, %s29
    %p40 = scmp.eq.s32.totalorder %s20, 0
    %p41 = por %p39, %p40
    %p42 = scmp.ne.s32.totalorder %s28, %s29
    %p43 = scmp.eq.s32.totalorder %s21, 1
    %p44 = por %p42, %p43
    %p46 = scmp.ne.s32.totalorder %s29, %s45
    %p47 = scmp.eq.s32.totalorder %s21, 0
    %p48 = por %p46, %p47
    %s49 = ssub.s32 %s15, %s22
    %p50 = scmp.eq.s32.totalorder %s49, 0
    %s52 = sadd.s32 %s51, 1
    %s53 = scalar_select %p50, %s51, %s52
    %p56 = pneg %p50
    %p57 = scmp.eq.s32.totalorder %s15, 1
    %p58 = por %p56, %p57
    %p59 = scmp.ne.s32.totalorder %s51, %s54
    %p60 = scmp.eq.s32.totalorder %s15, 0
    %p61 = por %p59, %p60
    %p62 = scmp.ne.s32.totalorder %s51, %s54
    %p63 = scmp.eq.s32.totalorder %s20, 1
    %p64 = por %p62, %p63
    %p65 = scmp.ne.s32.totalorder %s54, %s55
    %p66 = scmp.eq.s32.totalorder %s20, 0
    %p67 = por %p65, %p66
    %p68 = scmp.ne.s32.totalorder %s54, %s55
    %p69 = scmp.eq.s32.totalorder %s21, 1
    %p70 = por %p68, %p69
    %p72 = scmp.ne.s32.totalorder %s55, %s71
    %p73 = scmp.eq.s32.totalorder %s21, 0
    %p74 = por %p72, %p73
    %s76 = sadd.s32 %s75, 1
    %p79 = scmp.eq.s32.totalorder %s15, 1
    %p80 = scmp.ne.s32.totalorder %s75, %s77
    %p81 = scmp.eq.s32.totalorder %s15, 0
    %p82 = por %p80, %p81
    %p83 = scmp.ne.s32.totalorder %s75, %s77
    %p84 = scmp.eq.s32.totalorder %s20, 1
    %p85 = por %p83, %p84
    %p86 = scmp.ne.s32.totalorder %s77, %s78
    %p87 = scmp.eq.s32.totalorder %s20, 0
    %p88 = por %p86, %p87
    %p89 = scmp.ne.s32.totalorder %s77, %s78
    %p90 = scmp.eq.s32.totalorder %s21, 1
    %p91 = por %p89, %p90
    %p93 = scmp.ne.s32.totalorder %s78, %s92
    %p94 = scmp.eq.s32.totalorder %s21, 0
    %p95 = por %p93, %p94
    %s97 = sadd.s32 %s96, 1
    %p100 = scmp.eq.s32.totalorder %s15, 1
    %p101 = scmp.ne.s32.totalorder %s96, %s98
    %p102 = scmp.eq.s32.totalorder %s15, 0
    %p103 = por %p101, %p102
    %p104 = scmp.ne.s32.totalorder %s96, %s98
    %p105 = scmp.eq.s32.totalorder %s20, 1
    %p106 = por %p104, %p105
    %p107 = scmp.ne.s32.totalorder %s98, %s99
    %p108 = scmp.eq.s32.totalorder %s20, 0
    %p109 = por %p107, %p108
    %p110 = scmp.ne.s32.totalorder %s98, %s99
    %p111 = scmp.eq.s32.totalorder %s21, 1
    %p112 = por %p110, %p111
    %p114 = scmp.ne.s32.totalorder %s99, %s113
    %p115 = scmp.eq.s32.totalorder %s21, 0
    %p116 = por %p114, %p115
    %s118 = sadd.s32 %s117, 1
    %p121 = scmp.eq.s32.totalorder %s15, 1
    %p122 = scmp.ne.s32.totalorder %s117, %s119
    %p123 = scmp.eq.s32.totalorder %s15, 0
    %p124 = por %p122, %p123
    %p125 = scmp.ne.s32.totalorder %s117, %s119
    %p126 = scmp.eq.s32.totalorder %s20, 1
    %p127 = por %p125, %p126
    %p128 = scmp.ne.s32.totalorder %s119, %s120
    %p129 = scmp.eq.s32.totalorder %s20, 0
    %p130 = por %p128, %p129
    %p131 = scmp.ne.s32.totalorder %s119, %s120
    %p132 = scmp.eq.s32.totalorder %s21, 1
    %p133 = por %p131, %p132
    %p135 = scmp.ne.s32.totalorder %s120, %s134
    %p136 = scmp.eq.s32.totalorder %s21, 0
    %p137 = por %p135, %p136
    %s139 = sadd.s32 %s138, 1
    %p142 = scmp.eq.s32.totalorder %s15, 1
    %p143 = scmp.ne.s32.totalorder %s138, %s140
    %p144 = scmp.eq.s32.totalorder %s15, 0
    %p145 = por %p143, %p144
    %p146 = scmp.ne.s32.totalorder %s138, %s140
    %p147 = scmp.eq.s32.totalorder %s20, 1
    %p148 = por %p146, %p147
    %p149 = scmp.ne.s32.totalorder %s140, %s141
    %p150 = scmp.eq.s32.totalorder %s20, 0
    %p151 = por %p149, %p150
    %p152 = scmp.ne.s32.totalorder %s140, %s141
    %p153 = scmp.eq.s32.totalorder %s21, 1
    %p154 = por %p152, %p153
    %p156 = scmp.ne.s32.totalorder %s141, %s155
    %p157 = scmp.eq.s32.totalorder %s21, 0
    %p158 = por %p156, %p157
    %s160 = sadd.s32 %s159, 1
    %p163 = scmp.eq.s32.totalorder %s15, 1
    %p164 = scmp.ne.s32.totalorder %s159, %s161
    %p165 = scmp.eq.s32.totalorder %s15, 0
    %p166 = por %p164, %p165
    %p167 = scmp.ne.s32.totalorder %s159, %s161
    %p168 = scmp.eq.s32.totalorder %s20, 1
    %p169 = por %p167, %p168
    %p170 = scmp.ne.s32.totalorder %s161, %s162
    %p171 = scmp.eq.s32.totalorder %s20, 0
    %p172 = por %p170, %p171
    %p173 = scmp.ne.s32.totalorder %s161, %s162
    %p174 = scmp.eq.s32.totalorder %s21, 1
    %p175 = por %p173, %p174
    %p177 = scmp.ne.s32.totalorder %s162, %s176
    %p178 = scmp.eq.s32.totalorder %s21, 0
    %p179 = por %p177, %p178
    %s181 = sadd.s32 %s180, 1
    %p184 = scmp.eq.s32.totalorder %s15, 1
    %p185 = scmp.ne.s32.totalorder %s180, %s182
    %p186 = scmp.eq.s32.totalorder %s15, 0
    %p187 = por %p185, %p186
    %p188 = scmp.ne.s32.totalorder %s180, %s182
    %p189 = scmp.eq.s32.totalorder %s20, 1
    %p190 = por %p188, %p189
    %p191 = scmp.ne.s32.totalorder %s182, %s183
    %p192 = scmp.eq.s32.totalorder %s20, 0
    %p193 = por %p191, %p192
    %p194 = scmp.ne.s32.totalorder %s182, %s183
    %p195 = scmp.eq.s32.totalorder %s21, 1
    %p196 = por %p194, %p195
    %p198 = scmp.ne.s32.totalorder %s183, %s197
    %p199 = scmp.eq.s32.totalorder %s21, 0
    %p200 = por %p198, %p199
    %s202 = sadd.s32 %s201, 1
    %p205 = scmp.eq.s32.totalorder %s15, 1
    %p206 = scmp.ne.s32.totalorder %s201, %s203
    %p207 = scmp.eq.s32.totalorder %s15, 0
    %p208 = por %p206, %p207
    %p209 = scmp.ne.s32.totalorder %s201, %s203
    %p210 = scmp.eq.s32.totalorder %s20, 1
    %p211 = por %p209, %p210
    %p212 = scmp.ne.s32.totalorder %s203, %s204
    %p213 = scmp.eq.s32.totalorder %s20, 0
    %p214 = por %p212, %p213
    %p215 = scmp.ne.s32.totalorder %s203, %s204
    %p216 = scmp.eq.s32.totalorder %s21, 1
    %p217 = por %p215, %p216
    %p219 = scmp.ne.s32.totalorder %s204, %s218
    %p220 = scmp.eq.s32.totalorder %s21, 0
    %p221 = por %p219, %p220
    %s222 = ssub.s32 %s15, %s22
    %p223 = scmp.eq.s32.totalorder %s222, 0
    %s225 = sadd.s32 %s224, 1
    %s226 = scalar_select %p223, %s224, %s225
    %p229 = pneg %p223
    %p230 = scmp.eq.s32.totalorder %s15, 1
    %p231 = por %p229, %p230
    %p232 = scmp.ne.s32.totalorder %s224, %s227
    %p233 = scmp.eq.s32.totalorder %s15, 0
    %p234 = por %p232, %p233
    %p235 = scmp.ne.s32.totalorder %s224, %s227
    %p236 = scmp.eq.s32.totalorder %s20, 1
    %p237 = por %p235, %p236
    %p238 = scmp.ne.s32.totalorder %s227, %s228
    %p239 = scmp.eq.s32.totalorder %s20, 0
    %p240 = por %p238, %p239
    %p241 = scmp.ne.s32.totalorder %s227, %s228
    %p242 = scmp.eq.s32.totalorder %s21, 1
    %p243 = por %p241, %p242
    %p245 = scmp.ne.s32.totalorder %s228, %s244
    %p246 = scmp.eq.s32.totalorder %s21, 0
    %p247 = por %p245, %p246
    %p248 = scmp.le.s32.totalorder 1, %s15
    %p249 = scmp.lt.s32.totalorder %s15, 3
    %p250 = pnand %p248, %p249
    %p251 = pneg %p250
    // Predicated region
    $region9: #{qfunction_forward.1} parent=5 // pred_check
      _
    $region10: #{qfunction_forward.1} parent=5 // pred_check_branch
      %253 = sbr.rel (%p250) target = $region12
    $region11: #{qfunction_forward.1} parent=5 // pred_region
      %s254 = ssub.s32 %s15, 1
      // Predicated region
      $region13: #{qfunction_forward.1} parent=11 // pred_check
        %p255 = pneg %p88
      $region14: #{qfunction_forward.1} parent=11 // pred_check_branch
        %257 = sbr.rel (%p255) target = $region16
      $region15: #{qfunction_forward.1} parent=11 // pred_region
        _
      $region16: #{qfunction_forward.1} parent=11 // pred_fallthru
        _
      // Predicated region
      $region17: #{qfunction_forward.1} parent=11 // pred_check
        %p258 = pneg %p109
      $region18: #{qfunction_forward.1} parent=11 // pred_check_branch
        %260 = sbr.rel (%p258) target = $region20
      $region19: #{qfunction_forward.1} parent=11 // pred_region
        _
      $region20: #{qfunction_forward.1} parent=11 // pred_fallthru
        _
      // Predicated region
      $region21: #{qfunction_forward.1} parent=11 // pred_check
        %p261 = pneg %p130
      $region22: #{qfunction_forward.1} parent=11 // pred_check_branch
        %263 = sbr.rel (%p261) target = $region24
      $region23: #{qfunction_forward.1} parent=11 // pred_region
        _
      $region24: #{qfunction_forward.1} parent=11 // pred_fallthru
        _
      // Predicated region
      $region25: #{qfunction_forward.1} parent=11 // pred_check
        %p264 = pneg %p151
      $region26: #{qfunction_forward.1} parent=11 // pred_check_branch
        %266 = sbr.rel (%p264) target = $region28
      $region27: #{qfunction_forward.1} parent=11 // pred_region
        _
      $region28: #{qfunction_forward.1} parent=11 // pred_fallthru
        _
      // Predicated region
      $region29: #{qfunction_forward.1} parent=11 // pred_check
        %p267 = pneg %p172
      $region30: #{qfunction_forward.1} parent=11 // pred_check_branch
        %269 = sbr.rel (%p267) target = $region32
      $region31: #{qfunction_forward.1} parent=11 // pred_region
        _
      $region32: #{qfunction_forward.1} parent=11 // pred_fallthru
        _
      // Predicated region
      $region33: #{qfunction_forward.1} parent=11 // pred_check
        %p270 = pneg %p193
      $region34: #{qfunction_forward.1} parent=11 // pred_check_branch
        %272 = sbr.rel (%p270) target = $region36
      $region35: #{qfunction_forward.1} parent=11 // pred_region
        _
      $region36: #{qfunction_forward.1} parent=11 // pred_fallthru
        _
      // Predicated region
      $region37: #{qfunction_forward.1} parent=11 // pred_check
        %p273 = pneg %p214
      $region38: #{qfunction_forward.1} parent=11 // pred_check_branch
        %275 = sbr.rel (%p273) target = $region40
      $region39: #{qfunction_forward.1} parent=11 // pred_region
        _
      $region40: #{qfunction_forward.1} parent=11 // pred_fallthru
        _
    $region12: #{qfunction_forward.1} parent=5 // pred_fallthru
      _
    %p276 = scmp.lt.s32.totalorder %s15, 2
    // Predicated region
    $region41: #{qfunction_forward.1} parent=5 // pred_check
      %p277 = pneg %p276
    $region42: #{qfunction_forward.1} parent=5 // pred_check_branch
      %279 = sbr.rel (%p277) target = $region44
    $region43: #{qfunction_forward.1} parent=5 // pred_region
      // Predicated region
      $region45: #{qfunction_forward.1} parent=43 // pred_check
        %p280 = pneg %p35
      $region46: #{qfunction_forward.1} parent=43 // pred_check_branch
        %282 = sbr.rel (%p280) target = $region48
      $region47: #{qfunction_forward.1} parent=43 // pred_region
        %s283 = smul.u32 4, %s15
        %p284 = scmp.lt.s32.totalorder %s283, 7
        %s285 = scalar_select %p284, %s283, 7
        %s286 = smul.addr %s285, 8
        %s287 = scalar_lea.vmem %s0, %s286
        %s288 = smul.u32 4, %s15
      $region48: #{qfunction_forward.1} parent=43 // pred_fallthru
        _
      // Predicated region
      $region49: #{qfunction_forward.1} parent=43 // pred_check
        %p289 = pneg %p61
      $region50: #{qfunction_forward.1} parent=43 // pred_check_branch
        %291 = sbr.rel (%p289) target = $region52
      $region51: #{qfunction_forward.1} parent=43 // pred_region
        %s292 = smul.u32 4, %s15
        %p293 = scmp.lt.s32.totalorder %s292, 7
        %s294 = scalar_select %p293, %s292, 7
        %s295 = smul.addr %s294, 8
        %s296 = scalar_lea.vmem %s1, %s295
        %s297 = smul.u32 4, %s15
      $region52: #{qfunction_forward.1} parent=43 // pred_fallthru
        _
    $region44: #{qfunction_forward.1} parent=5 // pred_fallthru
      _
    %p298 = scmp.le.s32.totalorder 1, %s15
    %p299 = scmp.lt.s32.totalorder %s15, 3
    %p300 = pnand %p298, %p299
    %p301 = pneg %p300
    // Predicated region
    $region53: #{qfunction_forward.1} parent=5 // pred_check
      _
    $region54: #{qfunction_forward.1} parent=5 // pred_check_branch
      %303 = sbr.rel (%p300) target = $region56
    $region55: #{qfunction_forward.1} parent=5 // pred_region
      %s304 = ssub.s32 %s15, 1
      %s305 = smul.u32 4, %s20
      %p306 = scmp.lt.s32.totalorder %s305, 7
      %s307 = scalar_select %p306, %s305, 7
      %s308 = smul.addr %s307, 8
      %s309 = scalar_lea.vmem %s0, %s308
      %p310 = pneg %p41
      %p311 = pneg %p38
      %s312 = smul.u32 4, %s20
      %p313 = scmp.lt.s32.totalorder %s312, 7
      %s314 = scalar_select %p313, %s312, 7
      %s315 = smul.addr %s314, 8
      %s316 = scalar_lea.vmem %s1, %s315
      %p317 = pneg %p67
      %p318 = pneg %p64
      %p319 = pneg %p88
      %p320 = pneg %p85
      %p321 = pneg %p109
      %p322 = pneg %p106
      %p323 = pneg %p130
      %p324 = pneg %p127
      %p325 = pneg %p151
      %p326 = pneg %p148
      %p327 = pneg %p172
      %p328 = pneg %p169
      %p329 = pneg %p193
      %p330 = pneg %p190
      %p331 = pneg %p214
      %p332 = pneg %p211
      %p333 = pneg %p240
      %p334 = pneg %p237
      %s335 = smul.u32 4, %s20
      %p336 = scmp.lt.s32.totalorder %s335, 7
      %s337 = scalar_select %p336, %s335, 7
      %s338 = smul.addr %s337, 8
      %s339 = scalar_lea.vmem %s9, %s338
      %s340 = smul.u32 4, %s20
      %p341 = scmp.lt.s32.totalorder %s340, 7
      %s342 = scalar_select %p341, %s340, 7
      %s343 = smul.addr %s342, 8
      %s344 = scalar_lea.vmem %s0, %s343
      %s345 = smul.u32 4, %s20
      %s346 = smul.u32 4, %s20
      %p347 = scmp.lt.s32.totalorder %s346, 7
      %s348 = scalar_select %p347, %s346, 7
      %s349 = smul.addr %s348, 8
      %s350 = scalar_lea.vmem %s1, %s349
      %s351 = smul.u32 4, %s20
      %s352 = smul.u32 4, %s20
      %p353 = scmp.lt.s32.totalorder %s352, 7
      %s354 = scalar_select %p353, %s352, 7
      %s355 = smul.addr %s354, 8
      %s356 = scalar_lea.vmem %s9, %s355
      %s357 = smul.u32 4, %s20
      %v359 = vld [vmem:[%s344] sm:$0xff]
      %v360 = vld [vmem:[%s344 + $0x8] sm:$0xff]
      %v361 = vld [vmem:[%s344 + $0x10] sm:$0xff]
      %v362 = vld [vmem:[%s344 + $0x18] sm:$0xff]
      %v363 = vpack.c.bf16 %v360, %v359
      %v364 = vpack.c.bf16 %v362, %v361
      %v365 = vld [vmem:[%s350] sm:$0xff]
      %v366 = vld [vmem:[%s350 + $0x8] sm:$0xff]
      %v367 = vld [vmem:[%s350 + $0x10] sm:$0xff]
      %v368 = vld [vmem:[%s350 + $0x18] sm:$0xff]
      %v369 = vpack.c.bf16 %v366, %v365
      %v370 = vpack.c.bf16 %v368, %v367
      %v371 = vld [vmem:[%s2] sm:$0xf]
      %v372 = vld [vmem:[%s2 + $0x4] sm:$0xf]
      %v373 = vld [vmem:[%s2 + $0x8] sm:$0xf]
      %v374 = vld [vmem:[%s3] sm:$0xf]
      %vm375 = vcmask 64512
      %v377 = vsel %vm375, %v369, 0
      %v380 = vsel %vm375, %v370, 0
      %vm382 = vcmask 1043456
      %v384 = vsel %vm382, %v374, 0
      %386 = vmatprep.subr.bf16.mxu0 0
      %387 = vmatpush1.bf16.msra.mxu0 0
      %388 = vmatprep.subr.bf16.mxu0 0
      %389 = vmatpush1.bf16.msra.mxu0 0
      %390 = vmatprep.subr.bf16.mxu0 0
      %391 = vmatpush1.bf16.msra.mxu0 0
      %392 = vmatprep.subr.bf16.mxu0 0
      %393 = vmatpush1.bf16.msra.mxu0 0
      %394 = vmatprep.subr.bf16.mxu0 0
      %395 = vmatpush1.bf16.msra.mxu0 0
      %396 = vmatprep.subr.bf16.mxu0 0
      %397 = vmatpush1.bf16.msra.mxu0 0
      %398 = vmatprep.subr.bf16.mxu0 0
      %399 = vmatpush1.bf16.msra.mxu0 0
      %400 = vmatprep.subr.bf16.mxu0 0
      %401 = vmatpush1.bf16.msra.mxu0 %v384
      %402 = vmatprep.subr.bf16.mxu0 0
      %403 = vmatpush2.bf16.msra.mxu0 0
      %404 = vmatprep.subr.bf16.mxu0 0
      %405 = vmatpush2.bf16.msra.mxu0 0
      %406 = vmatprep.subr.bf16.mxu0 0
      %407 = vmatpush2.bf16.msra.mxu0 0
      %408 = vmatprep.subr.bf16.mxu0 0
      %409 = vmatpush2.bf16.msra.mxu0 0
      %410 = vmatprep.subr.bf16.mxu0 0
      %411 = vmatpush2.bf16.msra.mxu0 0
      %412 = vmatprep.subr.bf16.mxu0 0
      %413 = vmatpush2.bf16.msra.mxu0 0
      %414 = vmatprep.subr.bf16.mxu0 0
      %415 = vmatpush2.bf16.msra.mxu0 0
      %416 = vmatprep.subr.bf16.mxu0 0
      %417 = vmatpush2.bf16.msra.mxu0 0
      %418 = vmatprep.mubr.bf16.mxu0 0
      %419 = vmatmul.mubr.bf16.gmra.mxu0 %v377
      %v420 = vpop.f32.mrf.mxu0
      %v421 = vadd.f32 0.0, %v420
      %v422 = vpop.f32.mrf.mxu0
      %v423 = vpop.f32.mrf.mxu0
      %v424 = vadd.f32 0.0, %v423
      %v425 = vpop.f32.mrf.mxu0
      %426 = vmatprep.mubr.bf16.mxu0 0
      %427 = vmatmul.mubr.bf16.gmra.mxu0 %v380
      %v428 = vpop.f32.mrf.mxu0
      %v429 = vadd.f32 0.0, %v428
      %v430 = vpop.f32.mrf.mxu0
      %v431 = vpop.f32.mrf.mxu0
      %v432 = vadd.f32 0.0, %v431
      %v433 = vpop.f32.mrf.mxu0
      %434 = vdwg.mxu0
      %v438 = vunpack.c.l.b16 %v371
      %v439 = vunpack.c.l.b16 %v372
      %v440 = vunpack.c.l.b16 %v373
      %v441 = vpack.c.b16 %v439, %v438
      %v442 = vpack.c.b16 %v440, %v440
      %vm444 = vcmask 195584
      %v446 = vsel %vm444, %v363, 0
      %v449 = vsel %vm444, %v364, 0
      %v452 = vsel %vm382, %v442, 0
      %454 = vmatprep.subr.bf16.mxu0 0
      %455 = vmatpush1.bf16.msra.mxu0 0
      %456 = vmatprep.subr.bf16.mxu0 0
      %457 = vmatpush1.bf16.msra.mxu0 0
      %458 = vmatprep.subr.bf16.mxu0 0
      %459 = vmatpush1.bf16.msra.mxu0 0
      %460 = vmatprep.subr.bf16.mxu0 0
      %461 = vmatpush1.bf16.msra.mxu0 0
      %462 = vmatprep.subr.bf16.mxu0 0
      %463 = vmatpush1.bf16.msra.mxu0 0
      %464 = vmatprep.subr.bf16.mxu0 0
      %465 = vmatpush1.bf16.msra.mxu0 0
      %466 = vmatprep.subr.bf16.mxu0 0
      %467 = vmatpush1.bf16.msra.mxu0 %v452
      %468 = vmatprep.subr.bf16.mxu0 0
      %469 = vmatpush1.bf16.msra.mxu0 %v441
      %470 = vmatprep.subr.bf16.mxu0 0
      %471 = vmatpush2.bf16.msra.mxu0 0
      %472 = vmatprep.subr.bf16.mxu0 0
      %473 = vmatpush2.bf16.msra.mxu0 0
      %474 = vmatprep.subr.bf16.mxu0 0
      %475 = vmatpush2.bf16.msra.mxu0 0
      %476 = vmatprep.subr.bf16.mxu0 0
      %477 = vmatpush2.bf16.msra.mxu0 0
      %478 = vmatprep.subr.bf16.mxu0 0
      %479 = vmatpush2.bf16.msra.mxu0 0
      %480 = vmatprep.subr.bf16.mxu0 0
      %481 = vmatpush2.bf16.msra.mxu0 0
      %482 = vmatprep.subr.bf16.mxu0 0
      %483 = vmatpush2.bf16.msra.mxu0 0
      %484 = vmatprep.subr.bf16.mxu0 0
      %485 = vmatpush2.bf16.msra.mxu0 0
      %486 = vmatprep.mubr.bf16.mxu0 0
      %487 = vmatmul.mubr.bf16.gmra.mxu0 %v446
      %v488 = vpop.f32.mrf.mxu0
      %v489 = vadd.f32 %v421, %v488
      %v490 = vpop.f32.mrf.mxu0
      %v491 = vpop.f32.mrf.mxu0
      %v492 = vadd.f32 %v424, %v491
      %v493 = vpop.f32.mrf.mxu0
      %494 = vmatprep.mubr.bf16.mxu0 0
      %495 = vmatmul.mubr.bf16.gmra.mxu0 %v449
      %v496 = vpop.f32.mrf.mxu0
      %v497 = vadd.f32 %v429, %v496
      %v498 = vpop.f32.mrf.mxu0
      %v499 = vpop.f32.mrf.mxu0
      %v500 = vadd.f32 %v432, %v499
      %v501 = vpop.f32.mrf.mxu0
      %502 = vdwg.mxu0
      %v503 = vld [vmem:[%s4] sm:$0x1]
      %v505 = vlaneseq
      %v506 = vshrl.u32 %v505, 7
      %v507 = vsub.s32 0, %v506
      %v508 = vrot.slane %v503, %v507
      %v510 = vadd.f32 %v489, %v508
      %v511 = vadd.f32 %v492, %v508
      %v512 = vadd.f32 %v497, %v508
      %v513 = vadd.f32 %v500, %v508
      %v514 = vmax.f32 %v510, 0.0
      %v515 = vmax.f32 %v511, 0.0
      %v516 = vmax.f32 %v512, 0.0
      %v517 = vmax.f32 %v513, 0.0
      %v518 = vpack.c.bf16 %v515, %v514
      %v519 = vpack.c.bf16 %v517, %v516
      %v520 = vld [vmem:[%s5] sm:$0xf]
      %v521 = vld [vmem:[%s5 + $0x4] sm:$0xf]
      %v522 = vld [vmem:[%s5 + $0x8] sm:$0xf]
      %v523 = vld [vmem:[%s5 + $0xc] sm:$0xf]
      %v524 = vld [vmem:[%s5 + $0x10] sm:$0xf]
      %v525 = vld [vmem:[%s5 + $0x14] sm:$0xf]
      %v526 = vld [vmem:[%s5 + $0x18] sm:$0xf]
      %v527 = vld [vmem:[%s5 + $0x1c] sm:$0xf]
      %v528 = vld [vmem:[%s5 + $0x20] sm:$0xf]
      %v529 = vld [vmem:[%s5 + $0x24] sm:$0xf]
      %v530 = vld [vmem:[%s5 + $0x28] sm:$0xf]
      %v531 = vld [vmem:[%s5 + $0x2c] sm:$0xf]
      %v532 = vld [vmem:[%s5 + $0x30] sm:$0xf]
      %v533 = vld [vmem:[%s5 + $0x34] sm:$0xf]
      %v534 = vld [vmem:[%s5 + $0x38] sm:$0xf]
      %v535 = vld [vmem:[%s5 + $0x3c] sm:$0xf]
      %v536 = vld [vmem:[%s6] sm:$0x1]
      %v538 = vlaneseq
      %v539 = vshrl.u32 %v538, 7
      %v540 = vsub.s32 0, %v539
      %v541 = vrot.slane %v536, %v540
      %v559 = vunpack.c.l.b16 %v520
      %v560 = vunpack.c.l.b16 %v521
      %v561 = vunpack.c.l.b16 %v522
      %v562 = vunpack.c.l.b16 %v523
      %v563 = vunpack.c.l.b16 %v524
      %v564 = vunpack.c.l.b16 %v525
      %v565 = vunpack.c.l.b16 %v526
      %v566 = vunpack.c.l.b16 %v527
      %v567 = vunpack.c.l.b16 %v528
      %v568 = vunpack.c.l.b16 %v529
      %v569 = vunpack.c.l.b16 %v530
      %v570 = vunpack.c.l.b16 %v531
      %v571 = vunpack.c.l.b16 %v532
      %v572 = vunpack.c.l.b16 %v533
      %v573 = vunpack.c.l.b16 %v534
      %v574 = vunpack.c.l.b16 %v535
      %v575 = vpack.c.b16 %v560, %v559
      %v576 = vpack.c.b16 %v562, %v561
      %v577 = vpack.c.b16 %v564, %v563
      %v578 = vpack.c.b16 %v566, %v565
      %v579 = vpack.c.b16 %v568, %v567
      %v580 = vpack.c.b16 %v570, %v569
      %v581 = vpack.c.b16 %v572, %v571
      %v582 = vpack.c.b16 %v574, %v573
      %591 = vmatprep.subr.bf16.mxu0 0
      %592 = vmatpush1.bf16.msra.mxu0 %v582
      %593 = vmatprep.subr.bf16.mxu0 0
      %594 = vmatpush1.bf16.msra.mxu0 %v581
      %595 = vmatprep.subr.bf16.mxu0 0
      %596 = vmatpush1.bf16.msra.mxu0 %v580
      %597 = vmatprep.subr.bf16.mxu0 0
      %598 = vmatpush1.bf16.msra.mxu0 %v579
      %599 = vmatprep.subr.bf16.mxu0 0
      %600 = vmatpush1.bf16.msra.mxu0 %v578
      %601 = vmatprep.subr.bf16.mxu0 0
      %602 = vmatpush1.bf16.msra.mxu0 %v577
      %603 = vmatprep.subr.bf16.mxu0 0
      %604 = vmatpush1.bf16.msra.mxu0 %v576
      %605 = vmatprep.subr.bf16.mxu0 0
      %606 = vmatpush1.bf16.msra.mxu0 %v575
      %607 = vmatprep.subr.bf16.mxu0 0
      %608 = vmatpush2.bf16.msra.mxu0 0
      %609 = vmatprep.subr.bf16.mxu0 0
      %610 = vmatpush2.bf16.msra.mxu0 0
      %611 = vmatprep.subr.bf16.mxu0 0
      %612 = vmatpush2.bf16.msra.mxu0 0
      %613 = vmatprep.subr.bf16.mxu0 0
      %614 = vmatpush2.bf16.msra.mxu0 0
      %615 = vmatprep.subr.bf16.mxu0 0
      %616 = vmatpush2.bf16.msra.mxu0 0
      %617 = vmatprep.subr.bf16.mxu0 0
      %618 = vmatpush2.bf16.msra.mxu0 0
      %619 = vmatprep.subr.bf16.mxu0 0
      %620 = vmatpush2.bf16.msra.mxu0 0
      %621 = vmatprep.subr.bf16.mxu0 0
      %622 = vmatpush2.bf16.msra.mxu0 0
      %623 = vmatprep.mubr.bf16.mxu0 0
      %624 = vmatmul.mubr.bf16.gmra.mxu0 %v518
      %v625 = vpop.f32.mrf.mxu0
      %v626 = vadd.f32 %v541, %v625
      %v627 = vpop.f32.mrf.mxu0
      %v628 = vpop.f32.mrf.mxu0
      %v629 = vadd.f32 %v541, %v628
      %v630 = vpop.f32.mrf.mxu0
      %631 = vmatprep.mubr.bf16.mxu0 0
      %632 = vmatmul.mubr.bf16.gmra.mxu0 %v519
      %v633 = vpop.f32.mrf.mxu0
      %v634 = vadd.f32 %v541, %v633
      %v635 = vpop.f32.mrf.mxu0
      %v636 = vpop.f32.mrf.mxu0
      %v637 = vadd.f32 %v541, %v636
      %v638 = vpop.f32.mrf.mxu0
      %639 = vdwg.mxu0
      %v640 = vmax.f32 %v626, 0.0
      %v641 = vmax.f32 %v629, 0.0
      %v642 = vmax.f32 %v634, 0.0
      %v643 = vmax.f32 %v637, 0.0
      %v644 = vpack.c.bf16 %v641, %v640
      %v645 = vpack.c.bf16 %v643, %v642
      %v646 = vld [vmem:[%s7] sm:$0xf]
      %v647 = vld [vmem:[%s7 + $0x4] sm:$0xf]
      %v648 = vld [vmem:[%s7 + $0x8] sm:$0xf]
      %v649 = vld [vmem:[%s7 + $0xc] sm:$0xf]
      %v650 = vld [vmem:[%s7 + $0x10] sm:$0xf]
      %v651 = vld [vmem:[%s7 + $0x14] sm:$0xf]
      %v652 = vld [vmem:[%s7 + $0x18] sm:$0xf]
      %v653 = vld [vmem:[%s7 + $0x1c] sm:$0xf]
      %v654 = vld [vmem:[%s7 + $0x20] sm:$0xf]
      %v655 = vld [vmem:[%s7 + $0x24] sm:$0xf]
      %v656 = vld [vmem:[%s7 + $0x28] sm:$0xf]
      %v657 = vld [vmem:[%s7 + $0x2c] sm:$0xf]
      %v658 = vld [vmem:[%s7 + $0x30] sm:$0xf]
      %v659 = vld [vmem:[%s7 + $0x34] sm:$0xf]
      %v660 = vld [vmem:[%s7 + $0x38] sm:$0xf]
      %v661 = vld [vmem:[%s7 + $0x3c] sm:$0xf]
      %v662 = vld [vmem:[%s8] sm:$0x1]
      %v664 = vlaneseq
      %v665 = vshrl.u32 %v664, 7
      %v666 = vsub.s32 0, %v665
      %v667 = vrot.slane %v662, %v666
      %v685 = vunpack.c.l.b16 %v646
      %v686 = vunpack.c.l.b16 %v647
      %v687 = vunpack.c.l.b16 %v648
      %v688 = vunpack.c.l.b16 %v649
      %v689 = vunpack.c.l.b16 %v650
      %v690 = vunpack.c.l.b16 %v651
      %v691 = vunpack.c.l.b16 %v652
      %v692 = vunpack.c.l.b16 %v653
      %v693 = vunpack.c.l.b16 %v654
      %v694 = vunpack.c.l.b16 %v655
      %v695 = vunpack.c.l.b16 %v656
      %v696 = vunpack.c.l.b16 %v657
      %v697 = vunpack.c.l.b16 %v658
      %v698 = vunpack.c.l.b16 %v659
      %v699 = vunpack.c.l.b16 %v660
      %v700 = vunpack.c.l.b16 %v661
      %v701 = vpack.c.b16 %v686, %v685
      %v702 = vpack.c.b16 %v688, %v687
      %v703 = vpack.c.b16 %v690, %v689
      %v704 = vpack.c.b16 %v692, %v691
      %v705 = vpack.c.b16 %v694, %v693
      %v706 = vpack.c.b16 %v696, %v695
      %v707 = vpack.c.b16 %v698, %v697
      %v708 = vpack.c.b16 %v700, %v699
      %717 = vmatprep.subr.bf16.mxu0 0
      %718 = vmatpush1.bf16.msra.mxu0 %v708
      %719 = vmatprep.subr.bf16.mxu0 0
      %720 = vmatpush1.bf16.msra.mxu0 %v707
      %721 = vmatprep.subr.bf16.mxu0 0
      %722 = vmatpush1.bf16.msra.mxu0 %v706
      %723 = vmatprep.subr.bf16.mxu0 0
      %724 = vmatpush1.bf16.msra.mxu0 %v705
      %725 = vmatprep.subr.bf16.mxu0 0
      %726 = vmatpush1.bf16.msra.mxu0 %v704
      %727 = vmatprep.subr.bf16.mxu0 0
      %728 = vmatpush1.bf16.msra.mxu0 %v703
      %729 = vmatprep.subr.bf16.mxu0 0
      %730 = vmatpush1.bf16.msra.mxu0 %v702
      %731 = vmatprep.subr.bf16.mxu0 0
      %732 = vmatpush1.bf16.msra.mxu0 %v701
      %733 = vmatprep.subr.bf16.mxu0 0
      %734 = vmatpush2.bf16.msra.mxu0 0
      %735 = vmatprep.subr.bf16.mxu0 0
      %736 = vmatpush2.bf16.msra.mxu0 0
      %737 = vmatprep.subr.bf16.mxu0 0
      %738 = vmatpush2.bf16.msra.mxu0 0
      %739 = vmatprep.subr.bf16.mxu0 0
      %740 = vmatpush2.bf16.msra.mxu0 0
      %741 = vmatprep.subr.bf16.mxu0 0
      %742 = vmatpush2.bf16.msra.mxu0 0
      %743 = vmatprep.subr.bf16.mxu0 0
      %744 = vmatpush2.bf16.msra.mxu0 0
      %745 = vmatprep.subr.bf16.mxu0 0
      %746 = vmatpush2.bf16.msra.mxu0 0
      %747 = vmatprep.subr.bf16.mxu0 0
      %748 = vmatpush2.bf16.msra.mxu0 0
      %749 = vmatprep.mubr.bf16.mxu0 0
      %750 = vmatmul.mubr.bf16.gmra.mxu0 %v644
      %v751 = vpop.f32.mrf.mxu0
      %v752 = vadd.f32 %v667, %v751
      %v753 = vpop.f32.mrf.mxu0
      %v754 = vpop.f32.mrf.mxu0
      %v755 = vadd.f32 %v667, %v754
      %v756 = vpop.f32.mrf.mxu0
      %757 = vmatprep.mubr.bf16.mxu0 0
      %758 = vmatmul.mubr.bf16.gmra.mxu0 %v645
      %v759 = vpop.f32.mrf.mxu0
      %v760 = vadd.f32 %v667, %v759
      %v761 = vpop.f32.mrf.mxu0
      %v762 = vpop.f32.mrf.mxu0
      %v763 = vadd.f32 %v667, %v762
      %v764 = vpop.f32.mrf.mxu0
      %765 = vdwg.mxu0
      %vm766 = vcmask 31744
      %767 = vst.msk [vmem:[%s356] sm:$0xff] %vm766, %v752
      %768 = vst.msk [vmem:[%s356 + $0x8] sm:$0xff] %vm766, %v755
      %769 = vst.msk [vmem:[%s356 + $0x10] sm:$0xff] %vm766, %v760
      %770 = vst.msk [vmem:[%s356 + $0x18] sm:$0xff] %vm766, %v763
      %s771 = smul.u32 4, %s20
      %p772 = scmp.lt.s32.totalorder %s771, 7
      %s773 = scalar_select %p772, %s771, 7
      %s774 = smul.addr %s773, 8
      %s775 = scalar_lea.vmem %s9, %s774
      // Predicated region
      $region57: #{qfunction_forward.1} parent=55 // pred_check
        %p776 = pneg %p237
      $region58: #{qfunction_forward.1} parent=55 // pred_check_branch
        %778 = sbr.rel (%p776) target = $region60
      $region59: #{qfunction_forward.1} parent=55 // pred_region
        %s779 = smul.u32 4, %s20
      $region60: #{qfunction_forward.1} parent=55 // pred_fallthru
        _
    $region56: #{qfunction_forward.1} parent=5 // pred_fallthru
      _
    %p780 = scmp.le.s32.totalorder 2, %s15
    // Predicated region
    $region61: #{qfunction_forward.1} parent=5 // pred_check
      %p781 = pneg %p780
    $region62: #{qfunction_forward.1} parent=5 // pred_check_branch
      %783 = sbr.rel (%p781) target = $region64
    $region63: #{qfunction_forward.1} parent=5 // pred_region
      %s784 = ssub.s32 %s15, 2
      // Predicated region
      $region65: #{qfunction_forward.1} parent=63 // pred_check
        %p785 = pneg %p243
      $region66: #{qfunction_forward.1} parent=63 // pred_check_branch
        %787 = sbr.rel (%p785) target = $region68
      $region67: #{qfunction_forward.1} parent=63 // pred_region
        %s788 = smul.u32 4, %s21
        %p789 = scmp.lt.s32.totalorder %s788, 7
        %s790 = scalar_select %p789, %s788, 7
        %s791 = smul.addr %s790, 8
        %s792 = scalar_lea.vmem %s9, %s791
      $region68: #{qfunction_forward.1} parent=63 // pred_fallthru
        _
    $region64: #{qfunction_forward.1} parent=5 // pred_fallthru
      _
  $region6: #{qfunction_forward.1} parent=0 // loop_footer
    %s19 = sadd.s32 1, %s15
  $region7: #{qfunction_forward.1} parent=0 // loop_footer_branch
    %14 = sbr.rel target = $region3
  $region8: #{qfunction_forward.1} parent=0 // loop_exit
    _

</llo_original>
